<compile_context>
chip_gen: v5e
topology: v5e:2x2
jax: 0.10.0
libtpu: 0.0.40
codegen_flags: <defaults>
</compile_context>

<pallas_src>
import functools

import jax
import jax.numpy as jnp
from jax import lax
from jax.experimental import pallas as pl
from jax.experimental.pallas import tpu as pltpu

_LANE = 128  # TPU lane width; output last dims are padded to this for unmasked stores.


def _round_up(n: int, m: int) -> int:
    return ((n + m - 1) // m) * m


def _mlp_kernel(x_ref, w1_ref, b1_ref, w2_ref, b2_ref, feat_ref, out_ref):
    # Weights are in PyTorch [out_features, in_features] layout; contract dim 1 of the
    # activations with dim 1 of the weights (== x @ W^T) so no transpose is needed.
    x = x_ref[...]
    feat = (
        lax.dot_general(
            x,
            w1_ref[...],
            dimension_numbers=(((1,), (1,)), ((), ())),
            preferred_element_type=jnp.float32,
        )
        + b1_ref[...]  # f32 bias add before the final cast (v5e-friendly epilogue)
    )
    feat_ref[...] = feat.astype(feat_ref.dtype)

    out = (
        lax.dot_general(
            feat,
            w2_ref[...],
            dimension_numbers=(((1,), (1,)), ((), ())),
            preferred_element_type=jnp.float32,
        )
        + b2_ref[...]
    )
    out_ref[...] = out.astype(out_ref.dtype)


@functools.partial(jax.jit, static_argnames=("block_batch",))
def linear_regression_model_forward(x, w1, b1, w2, b2, *, block_batch: int = 512):
    """x: [B, in_f]; w1: [hidden, in_f]; b1: [hidden]; w2: [out_f, hidden]; b2: [out_f]."""
    B, in_f = x.shape
    hidden = w1.shape[0]
    out_f = w2.shape[0]

    # Pad feature dims to lane width so every output store is a full, unmasked vst.
    # NOTE: in a real model these pads would be applied once at parameter-init time.
    hidden_p = _round_up(hidden, _LANE)
    out_p = _round_up(out_f, _LANE)

    w1_p = w1 if hidden_p == hidden else jnp.pad(w1, ((0, hidden_p - hidden), (0, 0)))
    b1_p = jnp.pad(b1.reshape(1, hidden), ((0, 0), (0, hidden_p - hidden)))
    w2_p = jnp.pad(w2, ((0, out_p - out_f), (0, hidden_p - hidden)))
    b2_p = jnp.pad(b2.reshape(1, out_f), ((0, 0), (0, out_p - out_f)))

    out_shape = (
        jax.ShapeDtypeStruct((B, hidden_p), x.dtype),
        jax.ShapeDtypeStruct((B, out_p), x.dtype),
    )

    if B <= block_batch:
        # Small problem: everything fits in VMEM — no grid, no software pipeline.
        feat_p, out_full = pl.pallas_call(
            _mlp_kernel,
            out_shape=out_shape,
            in_specs=[pl.BlockSpec(memory_space=pltpu.MemorySpace.VMEM)] * 5,
            out_specs=(
                pl.BlockSpec(memory_space=pltpu.MemorySpace.VMEM),
                pl.BlockSpec(memory_space=pltpu.MemorySpace.VMEM),
            ),
        )(x, w1_p, b1_p, w2_p, b2_p)
    else:
        # Large batch: tile only the batch axis. Weights/biases map to block (0, 0)
        # for every grid step, so they stay resident in VMEM; only x/feat/out stream.
        tm = block_batch
        feat_p, out_full = pl.pallas_call(
            _mlp_kernel,
            out_shape=out_shape,
            grid=(pl.cdiv(B, tm),),
            in_specs=[
                pl.BlockSpec((tm, in_f), lambda i: (i, 0)),
                pl.BlockSpec((hidden_p, in_f), lambda i: (0, 0)),
                pl.BlockSpec((1, hidden_p), lambda i: (0, 0)),
                pl.BlockSpec((out_p, hidden_p), lambda i: (0, 0)),
                pl.BlockSpec((1, out_p), lambda i: (0, 0)),
            ],
            out_specs=(
                pl.BlockSpec((tm, hidden_p), lambda i: (i, 0)),
                pl.BlockSpec((tm, out_p), lambda i: (i, 0)),
            ),
            compiler_params=pltpu.CompilerParams(
                # "parallel" batch axis shards the grid across TensorCores (v7x 2-TC).
                dimension_semantics=("parallel",),
                # Explicit scoped-VMEM budget; tiles here are well under 32 MiB on all
                # generations (incl. v7x's 64 MiB physical VMEM).
                vmem_limit_bytes=32 * 1024 * 1024,
            ),
        )(x, w1_p, b1_p, w2_p, b2_p)

    # Slice the lane padding back off to the logical PyTorch shapes.
    feat = feat_p[:, :hidden]
    out = out_full[:, :out_f]
    return feat, out


if __name__ == "__main__":
    # Deterministic parameters / inputs (small shapes consistent with the module).
    input_features = 16
    hidden_units = 32
    output_features = 4
    batch = 8

    key = jax.random.PRNGKey(0)
    kx, kw1, kb1, kw2, kb2 = jax.random.split(key, 5)

    x = jax.random.normal(kx, (batch, input_features), dtype=jnp.float32)
    # PyTorch nn.Linear stores weight as [out_features, in_features].
    w1 = jax.random.normal(kw1, (hidden_units, input_features), dtype=jnp.float32) * 0.1
    b1 = jax.random.normal(kb1, (hidden_units,), dtype=jnp.float32) * 0.1
    w2 = jax.random.normal(kw2, (output_features, hidden_units), dtype=jnp.float32) * 0.1
    b2 = jax.random.normal(kb2, (output_features,), dtype=jnp.float32) * 0.1

    # Small-batch (no-grid) path.
    feat, out = jax.block_until_ready(
        linear_regression_model_forward(x, w1, b1, w2, b2)
    )
    feat_ref = x @ w1.T + b1
    out_ref = feat_ref @ w2.T + b2
    assert jnp.allclose(feat, feat_ref, atol=1e-4), "feature mismatch (small batch)"
    assert jnp.allclose(out, out_ref, atol=1e-4), "output mismatch (small batch)"

    # Exercise the batch-tiled path as well (weights resident in VMEM across the grid).
    xb = jax.random.normal(kx, (1024, input_features), dtype=jnp.float32)
    feat_b, out_b = jax.block_until_ready(
        linear_regression_model_forward(xb, w1, b1, w2, b2)
    )
    feat_b_ref = xb @ w1.T + b1
    out_b_ref = feat_b_ref @ w2.T + b2
    assert jnp.allclose(feat_b, feat_b_ref, atol=1e-4), "feature mismatch (tiled batch)"
    assert jnp.allclose(out_b, out_b_ref, atol=1e-4), "output mismatch (tiled batch)"

    print("KERNEL_OK")
</pallas_src>

<mosaic_0001>
module attributes {stable_mosaic.version = 11 : i64} {
  func.func @_mlp_kernel(%arg0: memref<8x16xf32, #tpu.memory_space<vmem>>, %arg1: memref<128x16xf32, #tpu.memory_space<vmem>>, %arg2: memref<1x128xf32, #tpu.memory_space<vmem>>, %arg3: memref<128x128xf32, #tpu.memory_space<vmem>>, %arg4: memref<1x128xf32, #tpu.memory_space<vmem>>, %arg5: memref<8x128xf32, #tpu.memory_space<vmem>>, %arg6: memref<8x128xf32, #tpu.memory_space<vmem>>) attributes {dimension_semantics = [], scalar_prefetch = 0 : i64, scratch_operands = 0 : i64, tpu.core_type = #tpu.core_type<tc>} {
    %c0 = arith.constant 0 : index
    %c0_0 = arith.constant 0 : index
    %0 = vector.load %arg0[%c0, %c0_0] : memref<8x16xf32, #tpu.memory_space<vmem>>, vector<8x16xf32>
    %c0_1 = arith.constant 0 : index
    %c0_2 = arith.constant 0 : index
    %1 = vector.load %arg1[%c0_1, %c0_2] : memref<128x16xf32, #tpu.memory_space<vmem>>, vector<128x16xf32>
    %cst = arith.constant dense<0.000000e+00> : vector<8x128xf32>
    %2 = tpu.matmul %0, %1, %cst {dimension_numbers = #tpu.dot_dimension_numbers<[1], [1], [0], [0], [0, 0, 1, 0], [], []>} : vector<8x16xf32>, vector<128x16xf32>, vector<8x128xf32> -> vector<8x128xf32>
    %c0_3 = arith.constant 0 : index
    %c0_4 = arith.constant 0 : index
    %3 = vector.load %arg2[%c0_3, %c0_4] : memref<1x128xf32, #tpu.memory_space<vmem>>, vector<1x128xf32>
    %4 = vector.broadcast %3 : vector<1x128xf32> to vector<8x128xf32>
    %5 = arith.addf %2, %4 : vector<8x128xf32>
    %c0_5 = arith.constant 0 : index
    %c0_6 = arith.constant 0 : index
    %6 = vector.load %arg5[%c0_5, %c0_6] : memref<8x128xf32, #tpu.memory_space<vmem>>, vector<8x128xf32>
    tpu.vector_store %arg5[%c0_5, %c0_6], %5 {strides = array<i32>} : memref<8x128xf32, #tpu.memory_space<vmem>>, vector<8x128xf32>,
    %c0_7 = arith.constant 0 : index
    %c0_8 = arith.constant 0 : index
    %7 = vector.load %arg3[%c0_7, %c0_8] : memref<128x128xf32, #tpu.memory_space<vmem>>, vector<128x128xf32>
    %cst_9 = arith.constant dense<0.000000e+00> : vector<8x128xf32>
    %8 = tpu.matmul %5, %7, %cst_9 {dimension_numbers = #tpu.dot_dimension_numbers<[1], [1], [0], [0], [0, 0, 1, 0], [], []>} : vector<8x128xf32>, vector<128x128xf32>, vector<8x128xf32> -> vector<8x128xf32>
    %c0_10 = arith.constant 0 : index
    %c0_11 = arith.constant 0 : index
    %9 = vector.load %arg4[%c0_10, %c0_11] : memref<1x128xf32, #tpu.memory_space<vmem>>, vector<1x128xf32>
    %10 = vector.broadcast %9 : vector<1x128xf32> to vector<8x128xf32>
    %11 = arith.addf %8, %10 : vector<8x128xf32>
    %c0_12 = arith.constant 0 : index
    %c0_13 = arith.constant 0 : index
    %12 = vector.load %arg6[%c0_12, %c0_13] : memref<8x128xf32, #tpu.memory_space<vmem>>, vector<8x128xf32>
    tpu.vector_store %arg6[%c0_12, %c0_13], %11 {strides = array<i32>} : memref<8x128xf32, #tpu.memory_space<vmem>>, vector<8x128xf32>,
    return
  }
}

</mosaic_0001>

<llo_original>
// kernel: linear_regression_model_forward.1
$region0: #{linear_regression_model_forward.1}
  #allocation0 [shape = 'u32[]', space=smem, size = 0x4, offset = 0x4, fixed_abs, tag = 'smem constant byte address 0x4 - core index']
  #allocation1 [shape = 'u32[72,128]{1,0:T(1,128)}', space=vmem, size = 0x9000, scoped, tag = 'internal scratch']
  %s0 = inlined_call_operand.vmem [shape: f32[8,16], index: 0, kind: input, shape index: {}]
  %s1 = inlined_call_operand.vmem [shape: f32[128,16], index: 1, kind: input, shape index: {}]
  %s2 = inlined_call_operand.vmem [shape: f32[1,128], index: 2, kind: input, shape index: {}]
  %s3 = inlined_call_operand.vmem [shape: f32[128,128], index: 3, kind: input, shape index: {}]
  %s4 = inlined_call_operand.vmem [shape: f32[1,128], index: 4, kind: input, shape index: {}]
  %s5 = inlined_call_operand.hbm [shape: f32[8,128], index: 5, kind: output, shape index: {0}]
  %s6 = inlined_call_operand.vmem [shape: f32[8,128], index: 6, kind: output, shape index: {1}]
  %7 = xla_tuple %s5, %s6
  %s8 = sld [smem:[#allocation0]]
  $region38: #{linear_regression_model_forward.1} parent=0
    _
  %s10 = ssub.s32 1, %s8
  %s11 = scalar_select 0, %s10, %s8
  $region1: #{linear_regression_model_forward.1} parent=0
    #allocation2 [shape = 'u8[4096]{0}', space=vmem, size = 0x1000, scoped, tag = 'output window, operand 0, single buffered']
    #allocation3 [shape = 's32[1]{0}', space=sflag, size = 0x4, scoped, tag = 'scoped memory for linear_regression_model_forward.1']
    %12 = vsyncpa [#allocation3], 0
    // Predicated region
    $region2: #{linear_regression_model_forward.1} parent=1 // pred_check
      _
    $region3: #{linear_regression_model_forward.1} parent=1 // pred_check_branch
      %14 = sbr.rel (0) target = $region5
    $region4: #{linear_regression_model_forward.1} parent=1 // pred_region
      _
    $region5: #{linear_regression_model_forward.1} parent=1 // pred_fallthru
      _
    // Predicated region
    $region6: #{linear_regression_model_forward.1} parent=1 // pred_check
      _
    $region7: #{linear_regression_model_forward.1} parent=1 // pred_check_branch
      %16 = sbr.rel (0) target = $region9
    $region8: #{linear_regression_model_forward.1} parent=1 // pred_region
      _
    $region9: #{linear_regression_model_forward.1} parent=1 // pred_fallthru
      _
    // Predicated region
    $region10: #{linear_regression_model_forward.1} parent=1 // pred_check
      _
    $region11: #{linear_regression_model_forward.1} parent=1 // pred_check_branch
      %18 = sbr.rel (0) target = $region13
    $region12: #{linear_regression_model_forward.1} parent=1 // pred_region
      _
    $region13: #{linear_regression_model_forward.1} parent=1 // pred_fallthru
      _
    // Predicated region
    $region14: #{linear_regression_model_forward.1} parent=1 // pred_check
      _
    $region15: #{linear_regression_model_forward.1} parent=1 // pred_check_branch
      %20 = sbr.rel (0) target = $region17
    $region16: #{linear_regression_model_forward.1} parent=1 // pred_region
      _
    $region17: #{linear_regression_model_forward.1} parent=1 // pred_fallthru
      _
    // Predicated region
    $region18: #{linear_regression_model_forward.1} parent=1 // pred_check
      _
    $region19: #{linear_regression_model_forward.1} parent=1 // pred_check_branch
      %22 = sbr.rel (0) target = $region21
    $region20: #{linear_regression_model_forward.1} parent=1 // pred_region
      _
    $region21: #{linear_regression_model_forward.1} parent=1 // pred_fallthru
      _
    %v23 = vld [vmem:[%s0] sm:$0xff]
    %v24 = vld [vmem:[%s1] sm:$0xff]
    %v25 = vld [vmem:[%s1 + $0x8] sm:$0xff]
    %v26 = vld [vmem:[%s1 + $0x10] sm:$0xff]
    %v27 = vld [vmem:[%s1 + $0x18] sm:$0xff]
    %v28 = vld [vmem:[%s1 + $0x20] sm:$0xff]
    %v29 = vld [vmem:[%s1 + $0x28] sm:$0xff]
    %v30 = vld [vmem:[%s1 + $0x30] sm:$0xff]
    %v31 = vld [vmem:[%s1 + $0x38] sm:$0xff]
    %v32 = vld [vmem:[%s1 + $0x40] sm:$0xff]
    %v33 = vld [vmem:[%s1 + $0x48] sm:$0xff]
    %v34 = vld [vmem:[%s1 + $0x50] sm:$0xff]
    %v35 = vld [vmem:[%s1 + $0x58] sm:$0xff]
    %v36 = vld [vmem:[%s1 + $0x60] sm:$0xff]
    %v37 = vld [vmem:[%s1 + $0x68] sm:$0xff]
    %v38 = vld [vmem:[%s1 + $0x70] sm:$0xff]
    %v39 = vld [vmem:[%s1 + $0x78] sm:$0xff]
    %v40 = vld [vmem:[%s2] sm:$0x1]
    %v42 = vperm.slane %v40, 0
    %vm44 = vcmask 130048
    %v46 = vsel %vm44, %v23, 0
    %v49 = vsel %vm44, %v24, 0
    %v52 = vsel %vm44, %v25, 0
    %v55 = vsel %vm44, %v26, 0
    %v58 = vsel %vm44, %v27, 0
    %v61 = vsel %vm44, %v28, 0
    %v64 = vsel %vm44, %v29, 0
    %v67 = vsel %vm44, %v30, 0
    %v70 = vsel %vm44, %v31, 0
    %v73 = vsel %vm44, %v32, 0
    %v76 = vsel %vm44, %v33, 0
    %v79 = vsel %vm44, %v34, 0
    %v82 = vsel %vm44, %v35, 0
    %v85 = vsel %vm44, %v36, 0
    %v88 = vsel %vm44, %v37, 0
    %v91 = vsel %vm44, %v38, 0
    %v94 = vsel %vm44, %v39, 0
    %96 = vmatpush.xpose.msra.mxu0 %v94
    %97 = vmatpush.xpose.msra.mxu0 %v91
    %98 = vmatpush.xpose.msra.mxu0 %v88
    %99 = vmatpush.xpose.msra.mxu0 %v85
    %100 = vmatpush.xpose.msra.mxu0 %v82
    %101 = vmatpush.xpose.msra.mxu0 %v79
    %102 = vmatpush.xpose.msra.mxu0 %v76
    %103 = vmatpush.xpose.msra.mxu0 %v73
    %104 = vmatpush.xpose.msra.mxu0 %v70
    %105 = vmatpush.xpose.msra.mxu0 %v67
    %106 = vmatpush.xpose.msra.mxu0 %v64
    %107 = vmatpush.xpose.msra.mxu0 %v61
    %108 = vmatpush.xpose.msra.mxu0 %v58
    %109 = vmatpush.xpose.msra.mxu0 %v55
    %110 = vmatpush.xpose.msra.mxu0 %v52
    %111 = vmatpush.xpose.msra.mxu0 %v49
    %112 = vmatmul.f32.gmra.mxu0 %v46
    %v113 = vpop.f32.mrf.mxu0
    %v114 = vadd.f32 %v42, %v113
    %115 = vdwg.mxu0
    %116 = vst [vmem:[#allocation2] sm:$0xff] %v114
    %v117 = vld [vmem:[%s3] sm:$0xff]
    %v118 = vld [vmem:[%s3 + $0x8] sm:$0xff]
    %v119 = vld [vmem:[%s3 + $0x10] sm:$0xff]
    %v120 = vld [vmem:[%s3 + $0x18] sm:$0xff]
    %v121 = vld [vmem:[%s3 + $0x20] sm:$0xff]
    %v122 = vld [vmem:[%s3 + $0x28] sm:$0xff]
    %v123 = vld [vmem:[%s3 + $0x30] sm:$0xff]
    %v124 = vld [vmem:[%s3 + $0x38] sm:$0xff]
    %v125 = vld [vmem:[%s3 + $0x40] sm:$0xff]
    %v126 = vld [vmem:[%s3 + $0x48] sm:$0xff]
    %v127 = vld [vmem:[%s3 + $0x50] sm:$0xff]
    %v128 = vld [vmem:[%s3 + $0x58] sm:$0xff]
    %v129 = vld [vmem:[%s3 + $0x60] sm:$0xff]
    %v130 = vld [vmem:[%s3 + $0x68] sm:$0xff]
    %v131 = vld [vmem:[%s3 + $0x70] sm:$0xff]
    %v132 = vld [vmem:[%s3 + $0x78] sm:$0xff]
    %v133 = vld [vmem:[%s4] sm:$0x1]
    %v135 = vperm.slane %v133, 0
    %137 = vmatpush.xpose.msra.mxu0 %v132
    %138 = vmatpush.xpose.msra.mxu0 %v131
    %139 = vmatpush.xpose.msra.mxu0 %v130
    %140 = vmatpush.xpose.msra.mxu0 %v129
    %141 = vmatpush.xpose.msra.mxu0 %v128
    %142 = vmatpush.xpose.msra.mxu0 %v127
    %143 = vmatpush.xpose.msra.mxu0 %v126
    %144 = vmatpush.xpose.msra.mxu0 %v125
    %145 = vmatpush.xpose.msra.mxu0 %v124
    %146 = vmatpush.xpose.msra.mxu0 %v123
    %147 = vmatpush.xpose.msra.mxu0 %v122
    %148 = vmatpush.xpose.msra.mxu0 %v121
    %149 = vmatpush.xpose.msra.mxu0 %v120
    %150 = vmatpush.xpose.msra.mxu0 %v119
    %151 = vmatpush.xpose.msra.mxu0 %v118
    %152 = vmatpush.xpose.msra.mxu0 %v117
    %153 = vmatmul.f32.gmra.mxu0 %v114
    %v154 = vpop.f32.mrf.mxu0
    %v155 = vadd.f32 %v135, %v154
    %156 = vdwg.mxu0
    %157 = vst [vmem:[%s6] sm:$0xff] %v155
    // Predicated region
    $region22: #{linear_regression_model_forward.1} parent=1 // pred_check
      _
    $region23: #{linear_regression_model_forward.1} parent=1 // pred_check_branch
      %159 = sbr.rel (0) target = $region25
    $region24: #{linear_regression_model_forward.1} parent=1 // pred_region
      %161 = vsyncadd [#allocation3], 0
      %s163 = sshll.u32 [#allocation2], 4
      %s164 = int_to_ptr.vmem [resolvable:$true] %s163
      %s165 = sshll.u32 %s5, 4
      %s166 = int_to_ptr.hbm [resolvable:$true] %s165
      %168 = dma.vmem_to_hbm [thread:$0]  %s164, 128, %s166, [#allocation3]
    $region25: #{linear_regression_model_forward.1} parent=1 // pred_fallthru
      _
    // Predicated region
    $region26: #{linear_regression_model_forward.1} parent=1 // pred_check
      _
    $region27: #{linear_regression_model_forward.1} parent=1 // pred_check_branch
      %170 = sbr.rel (0) target = $region29
    $region28: #{linear_regression_model_forward.1} parent=1 // pred_region
      _
    $region29: #{linear_regression_model_forward.1} parent=1 // pred_fallthru
      _
    // Predicated region
    $region30: #{linear_regression_model_forward.1} parent=1 // pred_check
      _
    $region31: #{linear_regression_model_forward.1} parent=1 // pred_check_branch
      %172 = sbr.rel (0) target = $region33
    $region32: #{linear_regression_model_forward.1} parent=1 // pred_region
      %174 = dma.done [#allocation3], 128
    $region33: #{linear_regression_model_forward.1} parent=1 // pred_fallthru
      _
    // Predicated region
    $region34: #{linear_regression_model_forward.1} parent=1 // pred_check
      _
    $region35: #{linear_regression_model_forward.1} parent=1 // pred_check_branch
      %176 = sbr.rel (0) target = $region37
    $region36: #{linear_regression_model_forward.1} parent=1 // pred_region
      _
    $region37: #{linear_regression_model_forward.1} parent=1 // pred_fallthru
      _
    %177 = vsyncpa [#allocation3], 1

</llo_original>
